<compile_context>
chip_gen: v7x
topology: tpu7x:2x2x1
jax: 0.10.0
libtpu: 0.0.40
codegen_flags: <defaults>
</compile_context>

<pallas_src>
import jax
import jax.numpy as jnp
from jax.experimental import pallas as pl
from jax.experimental.pallas import tpu as pltpu


def _round_up(x, m):
    return ((x + m - 1) // m) * m


def _largest_mult128_divisor(f, cap):
    """Largest multiple-of-128 divisor of f that is <= cap (0 if none)."""
    if f % 128 != 0:
        return 0
    m = f // 128
    best = 0
    d = 1
    while d * d <= m:
        if m % d == 0:
            for q in (d, m // d):
                t = q * 128
                if t <= cap and t > best:
                    best = t
        d += 1
    return best


def _linear_kernel(x_ref, w_ref, b_ref, o_ref):
    # x_ref: [tm, tk] f32, w_ref: [tk, Np] f32 (K-major), b_ref: [1, Np] f32,
    # o_ref: [tm, Np] f32 (resident across the k axis -> direct accumulation).
    k = pl.program_id(1)

    partial = jnp.dot(
        x_ref[...].astype(jnp.bfloat16),
        w_ref[...].astype(jnp.bfloat16),
        preferred_element_type=jnp.float32,
    )

    @pl.when(k == 0)
    def _():
        o_ref[...] = partial

    @pl.when(k > 0)
    def _():
        o_ref[...] += partial

    @pl.when(k == pl.num_programs(1) - 1)
    def _():
        o_ref[...] += b_ref[...]


def scalable_resnet_ng_forward(x_nchw, w, b, *, tm=512, tk=4096,
                               vmem_limit_bytes=48 * 1024 * 1024):
    """Forward pass of ScalableResNetNG with growth=[].

    Args:
      x_nchw: [B, C, H, W] float32 (NCHW, like PyTorch).
      w:      [nclasses, C*H*W] float32 (PyTorch nn.Linear weight layout).
      b:      [nclasses] float32.
    Returns:
      logits: [B, nclasses] float32.
    """
    B, C, H, W = x_nchw.shape
    F = C * H * W
    nclasses = w.shape[0]
    Np = _round_up(max(nclasses, 1), 128)  # lane-dense output width

    # Flatten in C, H, W order exactly like nn.Flatten on NCHW input (free).
    x_flat = x_nchw.reshape(B, F)

    # --- K tiling (avoid copying/padding x whenever possible) ---
    if F <= tk:
        tk_eff = F          # single K tile; block last dim == full array dim
        Fp = F
    else:
        tk_eff = _largest_mult128_divisor(F, tk)
        if tk_eff >= 512:
            Fp = F          # clean multi-tile K, no padding
        else:
            # Ragged fallback: zero-pad x along K (extra HBM pass; rare).
            tk_eff = tk
            Fp = _round_up(F, tk_eff)
            x_flat = jnp.zeros((B, Fp), x_flat.dtype).at[:, :F].set(x_flat)

    # --- M tiling ---
    if B >= 512:
        # Keep >= 2 M tiles so the "parallel" axis shards across v7x's 2 TCs.
        tm_eff = min(tm, _round_up(pl.cdiv(B, 2), 8))
    else:
        tm_eff = min(tm, B)  # single tile for small B (block dim == array dim)
    grid_m = pl.cdiv(B, tm_eff)
    grid_k = Fp // tk_eff

    # One-time weight prep: K-major [Fp, Np] so the MXU gets a native [K, N]
    # RHS and the output is lane-dense. This is tiny (w has <= 128 rows).
    wp = jnp.zeros((Fp, Np), jnp.float32).at[:F, :nclasses].set(
        jnp.asarray(w, jnp.float32).T)
    bp = jnp.zeros((1, Np), jnp.float32).at[0, :nclasses].set(
        jnp.asarray(b, jnp.float32))

    out = pl.pallas_call(
        _linear_kernel,
        out_shape=jax.ShapeDtypeStruct((B, Np), jnp.float32),
        grid_spec=pltpu.PrefetchScalarGridSpec(
            num_scalar_prefetch=0,
            grid=(grid_m, grid_k),
            in_specs=[
                pl.BlockSpec((tm_eff, tk_eff), lambda i, k: (i, k)),
                pl.BlockSpec((tk_eff, Np), lambda i, k: (k, 0)),
                pl.BlockSpec((1, Np), lambda i, k: (0, 0)),
            ],
            out_specs=pl.BlockSpec((tm_eff, Np), lambda i, k: (i, 0)),
        ),
        compiler_params=pltpu.CompilerParams(
            dimension_semantics=("parallel", "arbitrary"),
            vmem_limit_bytes=vmem_limit_bytes,
        ),
        cost_estimate=pl.CostEstimate(
            flops=2 * B * Fp * Np,
            transcendentals=0,
            bytes_accessed=(B * Fp * 4 + grid_m * Fp * Np * 4
                            + Np * 4 + B * Np * 4),
        ),
    )(x_flat, wp, bp)

    return out[:, :nclasses]


if __name__ == "__main__":
    # Module defaults: in_planes=4, input_size=[8, 8], nclasses=10, growth=[].
    B, C, H, W = 2, 4, 8, 8
    NCLASSES = 10
    F = C * H * W

    key = jax.random.PRNGKey(0)
    kx, kw, kb = jax.random.split(key, 3)

    x = jax.random.normal(kx, (B, C, H, W), dtype=jnp.float32)

    # Deterministic Linear parameter init (PyTorch-style uniform bounds).
    bound = float(1.0 / (F ** 0.5))
    w = jax.random.uniform(kw, (NCLASSES, F), jnp.float32, -bound, bound)
    b = jax.random.uniform(kb, (NCLASSES,), jnp.float32, -bound, bound)

    logits = scalable_resnet_ng_forward(x, w, b)
    jax.block_until_ready(logits)

    # Reference: same bf16 rounding of the matmul operands, f32 accumulation.
    x_bf = x.reshape(B, F).astype(jnp.bfloat16).astype(jnp.float32)
    w_bf = w.astype(jnp.bfloat16).astype(jnp.float32)
    ref = x_bf @ w_bf.T + b

    assert logits.shape == (B, NCLASSES)
    assert jnp.allclose(logits, ref, atol=1e-4, rtol=1e-4), float(
        jnp.max(jnp.abs(logits - ref)))

    print("KERNEL_OK")
</pallas_src>

<mosaic_0001>
module attributes {stable_mosaic.version = 11 : i64} {
  func.func @_linear_kernel(%arg0: i32, %arg1: i32, %arg2: memref<2x256xf32, #tpu.memory_space<vmem>>, %arg3: memref<256x128xf32, #tpu.memory_space<vmem>>, %arg4: memref<1x128xf32, #tpu.memory_space<vmem>>, %arg5: memref<2x128xf32, #tpu.memory_space<vmem>>) attributes {dimension_semantics = [#tpu.dimension_semantics<parallel>, #tpu.dimension_semantics<arbitrary>], iteration_bounds = array<i64: 1, 1>, scalar_prefetch = 0 : i64, scratch_operands = 0 : i64, tpu.core_type = #tpu.core_type<tc>, window_params = [{transform_indices = @transform_0, window_bounds = array<i64: 2, 256>}, {transform_indices = @transform_1, window_bounds = array<i64: 256, 128>}, {pipeline_mode = #tpu.pipeline_mode<synchronous>, transform_indices = @transform_2, window_bounds = array<i64: 1, 128>}, {transform_indices = @transform_3, window_bounds = array<i64: 2, 128>}]} {
    %c0 = arith.constant 0 : index
    %c0_0 = arith.constant 0 : index
    %0 = vector.load %arg2[%c0, %c0_0] : memref<2x256xf32, #tpu.memory_space<vmem>>, vector<2x256xf32>
    %1 = arith.truncf %0 : vector<2x256xf32> to vector<2x256xbf16>
    %c0_1 = arith.constant 0 : index
    %c0_2 = arith.constant 0 : index
    %2 = vector.load %arg3[%c0_1, %c0_2] : memref<256x128xf32, #tpu.memory_space<vmem>>, vector<256x128xf32>
    %3 = arith.truncf %2 : vector<256x128xf32> to vector<256x128xbf16>
    %cst = arith.constant dense<0.000000e+00> : vector<2x128xf32>
    %4 = tpu.matmul %1, %3, %cst {dimension_numbers = #tpu.dot_dimension_numbers<[1], [0], [0], [1], [0, 0, 1, 1], [], []>} : vector<2x256xbf16>, vector<256x128xbf16>, vector<2x128xf32> -> vector<2x128xf32>
    %c0_i32 = arith.constant 0 : i32
    %5 = arith.cmpi eq, %arg1, %c0_i32 : i32
    %6 = arith.extui %5 : i1 to i32
    %c0_i32_3 = arith.constant 0 : i32
    %7 = arith.cmpi ne, %6, %c0_i32_3 : i32
    scf.if %7 {
      %c0_8 = arith.constant 0 : index
      %c0_9 = arith.constant 0 : index
      %14 = vector.load %arg5[%c0_8, %c0_9] : memref<2x128xf32, #tpu.memory_space<vmem>>, vector<2x128xf32>
      tpu.vector_store %arg5[%c0_8, %c0_9], %4 {strides = array<i32>} : memref<2x128xf32, #tpu.memory_space<vmem>>, vector<2x128xf32>,
    } else {
    }
    %c0_i32_4 = arith.constant 0 : i32
    %8 = arith.cmpi sgt, %arg1, %c0_i32_4 : i32
    %9 = arith.extui %8 : i1 to i32
    %c0_i32_5 = arith.constant 0 : i32
    %10 = arith.cmpi ne, %9, %c0_i32_5 : i32
    scf.if %10 {
      %c0_8 = arith.constant 0 : index
      %c0_9 = arith.constant 0 : index
      %14 = vector.load %arg5[%c0_8, %c0_9] : memref<2x128xf32, #tpu.memory_space<vmem>>, vector<2x128xf32>
      %15 = arith.addf %14, %4 : vector<2x128xf32>
      %c0_10 = arith.constant 0 : index
      %c0_11 = arith.constant 0 : index
      %16 = vector.load %arg5[%c0_10, %c0_11] : memref<2x128xf32, #tpu.memory_space<vmem>>, vector<2x128xf32>
      tpu.vector_store %arg5[%c0_10, %c0_11], %15 {strides = array<i32>} : memref<2x128xf32, #tpu.memory_space<vmem>>, vector<2x128xf32>,
    } else {
    }
    %c0_i32_6 = arith.constant 0 : i32
    %11 = arith.cmpi eq, %arg1, %c0_i32_6 : i32
    %12 = arith.extui %11 : i1 to i32
    %c0_i32_7 = arith.constant 0 : i32
    %13 = arith.cmpi ne, %12, %c0_i32_7 : i32
    scf.if %13 {
      %c0_8 = arith.constant 0 : index
      %c0_9 = arith.constant 0 : index
      %14 = vector.load %arg5[%c0_8, %c0_9] : memref<2x128xf32, #tpu.memory_space<vmem>>, vector<2x128xf32>
      %c0_10 = arith.constant 0 : index
      %c0_11 = arith.constant 0 : index
      %15 = vector.load %arg4[%c0_10, %c0_11] : memref<1x128xf32, #tpu.memory_space<vmem>>, vector<1x128xf32>
      %16 = vector.broadcast %15 : vector<1x128xf32> to vector<2x128xf32>
      %17 = arith.addf %14, %16 : vector<2x128xf32>
      %c0_12 = arith.constant 0 : index
      %c0_13 = arith.constant 0 : index
      %18 = vector.load %arg5[%c0_12, %c0_13] : memref<2x128xf32, #tpu.memory_space<vmem>>, vector<2x128xf32>
      tpu.vector_store %arg5[%c0_12, %c0_13], %17 {strides = array<i32>} : memref<2x128xf32, #tpu.memory_space<vmem>>, vector<2x128xf32>,
    } else {
    }
    return
  }
  func.func @transform_0(%arg0: i32, %arg1: i32) -> (i32, i32) {
    %c0_i32 = arith.constant 0 : i32
    return %arg0, %arg1 : i32, i32
  }
  func.func @transform_1(%arg0: i32, %arg1: i32) -> (i32, i32) {
    %c0_i32 = arith.constant 0 : i32
    %c0_i32_0 = arith.constant 0 : i32
    return %arg1, %c0_i32 : i32, i32
  }
  func.func @transform_2(%arg0: i32, %arg1: i32) -> (i32, i32) {
    %c0_i32 = arith.constant 0 : i32
    %c0_i32_0 = arith.constant 0 : i32
    %c0_i32_1 = arith.constant 0 : i32
    return %c0_i32, %c0_i32_0 : i32, i32
  }
  func.func @transform_3(%arg0: i32, %arg1: i32) -> (i32, i32) {
    %c0_i32 = arith.constant 0 : i32
    %c0_i32_0 = arith.constant 0 : i32
    return %arg0, %c0_i32 : i32, i32
  }
}

</mosaic_0001>

<llo_original>
// kernel: tpu_custom_call.1
$region0: #{tpu_custom_call.1}
  #allocation0 [shape = 'u32[]', space=smem, size = 0x4, offset = 0x4, fixed_abs, tag = 'smem constant byte address 0x4 - core index']
  #allocation1 [shape = 'u32[144,128]{1,0:T(1,128)}', space=vmem, size = 0x12000, scoped, tag = 'internal scratch']
  %s0 = inlined_call_operand.hbm [shape: f32[2,256], index: 0, kind: input, shape index: {}]
  %s1 = inlined_call_operand.hbm [shape: f32[256,128], index: 1, kind: input, shape index: {}]
  %s2 = inlined_call_operand.vmem [shape: f32[1,128], index: 2, kind: input, shape index: {}]
  %s3 = inlined_call_operand.hbm [shape: f32[2,128], index: 3, kind: output, shape index: {}]
  %s4 = sld [smem:[#allocation0]]
  $region42: #{tpu_custom_call.1} parent=0
    _
  %s6 = ssub.s32 1, %s4
  %s7 = scalar_select 0, %s6, %s4
  $region1: #{tpu_custom_call.1} parent=0
    #allocation2 [shape = 'u8[2048]{0}', space=vmem, size = 0x800, scoped, tag = 'input window, operand 0, single buffered']
    #allocation3 [shape = 's32[1]{0}', space=sflag, size = 0x4, scoped, tag = 'scoped memory for tpu_custom_call.1']
    #allocation4 [shape = 's32[1]{0}', space=sflag, size = 0x4, scoped, tag = 'scoped memory for tpu_custom_call.1']
    #allocation5 [shape = 'u8[131072]{0}', space=vmem, size = 0x20000, scoped, tag = 'input window, operand 1, single buffered']
    #allocation6 [shape = 's32[1]{0}', space=sflag, size = 0x4, scoped, tag = 'scoped memory for tpu_custom_call.1']
    #allocation7 [shape = 'u8[1024]{0}', space=vmem, size = 0x400, scoped, tag = 'output window, operand 0, single buffered']
    %8 = vsyncpa [#allocation3], 0
    %9 = vsyncpa [#allocation6], 0
    %10 = vsyncpa [#allocation4], 0
    // Predicated region
    $region2: #{tpu_custom_call.1} parent=1 // pred_check
      _
    $region3: #{tpu_custom_call.1} parent=1 // pred_check_branch
      %12 = sbr.rel (0) target = $region5
    $region4: #{tpu_custom_call.1} parent=1 // pred_region
      %s14 = ssub.s32 64, 64
      %15 = vsyncadd [#allocation3], %s14
      %s17 = sshll.u32 [#allocation2], 4
      %s18 = int_to_ptr.vmem [resolvable:$true] %s17
      %20 = dma.hbm_to_vmem [thread:$0]  %s0, 64, %s18, [#allocation3]
    $region5: #{tpu_custom_call.1} parent=1 // pred_fallthru
      _
    // Predicated region
    $region6: #{tpu_custom_call.1} parent=1 // pred_check
      _
    $region7: #{tpu_custom_call.1} parent=1 // pred_check_branch
      %22 = sbr.rel (0) target = $region9
    $region8: #{tpu_custom_call.1} parent=1 // pred_region
      %s24 = ssub.s32 4096, 4096
      %25 = vsyncadd [#allocation6], %s24
      %s26 = sshll.u32 [#allocation5], 4
      %s27 = int_to_ptr.vmem [resolvable:$true] %s26
      %32 = dma.hbm_to_vmem [thread:$0]  %s1, 4096, %s27, [#allocation6], 128, 128, 8
    $region9: #{tpu_custom_call.1} parent=1 // pred_fallthru
      _
    // Predicated region
    $region10: #{tpu_custom_call.1} parent=1 // pred_check
      _
    $region11: #{tpu_custom_call.1} parent=1 // pred_check_branch
      %34 = sbr.rel (0) target = $region13
    $region12: #{tpu_custom_call.1} parent=1 // pred_region
      _
    $region13: #{tpu_custom_call.1} parent=1 // pred_fallthru
      _
    // Predicated region
    $region14: #{tpu_custom_call.1} parent=1 // pred_check
      _
    $region15: #{tpu_custom_call.1} parent=1 // pred_check_branch
      %36 = sbr.rel (0) target = $region17
    $region16: #{tpu_custom_call.1} parent=1 // pred_region
      %37 = dma.done [#allocation3], 64
    $region17: #{tpu_custom_call.1} parent=1 // pred_fallthru
      _
    // Predicated region
    $region18: #{tpu_custom_call.1} parent=1 // pred_check
      _
    $region19: #{tpu_custom_call.1} parent=1 // pred_check_branch
      %39 = sbr.rel (0) target = $region21
    $region20: #{tpu_custom_call.1} parent=1 // pred_region
      %40 = dma.done [#allocation6], 4096
    $region21: #{tpu_custom_call.1} parent=1 // pred_fallthru
      _
    %v42 = vld [vmem:[#allocation2] sm:$0xf]
    %v45 = vunpack.c.l.s4 1983009808
    %v46 = vunpack.c.0.s8 %v45
    %v47 = vlaneseq
    %v48 = vshrl.u32 %v47, 7
    %v49 = vsub.s32 %v46, %v48
    %v50 = vrot.slane %v42, %v49
    %v51 = vcombine.high %v50, %v50
    %v54 = vpack.c.bf16 %v50, %v50
    %v55 = vpack.c.bf16 %v51, %v51
    %v56 = vld [vmem:[#allocation5] sm:$0xff]
    %v57 = vld [vmem:[#allocation5 + $0x8] sm:$0xff]
    %v58 = vld [vmem:[#allocation5 + $0x10] sm:$0xff]
    %v59 = vld [vmem:[#allocation5 + $0x18] sm:$0xff]
    %v60 = vld [vmem:[#allocation5 + $0x20] sm:$0xff]
    %v61 = vld [vmem:[#allocation5 + $0x28] sm:$0xff]
    %v62 = vld [vmem:[#allocation5 + $0x30] sm:$0xff]
    %v63 = vld [vmem:[#allocation5 + $0x38] sm:$0xff]
    %v64 = vld [vmem:[#allocation5 + $0x40] sm:$0xff]
    %v65 = vld [vmem:[#allocation5 + $0x48] sm:$0xff]
    %v66 = vld [vmem:[#allocation5 + $0x50] sm:$0xff]
    %v67 = vld [vmem:[#allocation5 + $0x58] sm:$0xff]
    %v68 = vld [vmem:[#allocation5 + $0x60] sm:$0xff]
    %v69 = vld [vmem:[#allocation5 + $0x68] sm:$0xff]
    %v70 = vld [vmem:[#allocation5 + $0x70] sm:$0xff]
    %v71 = vld [vmem:[#allocation5 + $0x78] sm:$0xff]
    %v72 = vld [vmem:[#allocation5 + $0x80] sm:$0xff]
    %v73 = vld [vmem:[#allocation5 + $0x88] sm:$0xff]
    %v74 = vld [vmem:[#allocation5 + $0x90] sm:$0xff]
    %v75 = vld [vmem:[#allocation5 + $0x98] sm:$0xff]
    %v76 = vld [vmem:[#allocation5 + $0xa0] sm:$0xff]
    %v77 = vld [vmem:[#allocation5 + $0xa8] sm:$0xff]
    %v78 = vld [vmem:[#allocation5 + $0xb0] sm:$0xff]
    %v79 = vld [vmem:[#allocation5 + $0xb8] sm:$0xff]
    %v80 = vld [vmem:[#allocation5 + $0xc0] sm:$0xff]
    %v81 = vld [vmem:[#allocation5 + $0xc8] sm:$0xff]
    %v82 = vld [vmem:[#allocation5 + $0xd0] sm:$0xff]
    %v83 = vld [vmem:[#allocation5 + $0xd8] sm:$0xff]
    %v84 = vld [vmem:[#allocation5 + $0xe0] sm:$0xff]
    %v85 = vld [vmem:[#allocation5 + $0xe8] sm:$0xff]
    %v86 = vld [vmem:[#allocation5 + $0xf0] sm:$0xff]
    %v87 = vld [vmem:[#allocation5 + $0xf8] sm:$0xff]
    %v88 = vpack.c.bf16 %v57, %v56
    %v89 = vpack.c.bf16 %v59, %v58
    %v90 = vpack.c.bf16 %v61, %v60
    %v91 = vpack.c.bf16 %v63, %v62
    %v92 = vpack.c.bf16 %v65, %v64
    %v93 = vpack.c.bf16 %v67, %v66
    %v94 = vpack.c.bf16 %v69, %v68
    %v95 = vpack.c.bf16 %v71, %v70
    %v96 = vpack.c.bf16 %v73, %v72
    %v97 = vpack.c.bf16 %v75, %v74
    %v98 = vpack.c.bf16 %v77, %v76
    %v99 = vpack.c.bf16 %v79, %v78
    %v100 = vpack.c.bf16 %v81, %v80
    %v101 = vpack.c.bf16 %v83, %v82
    %v102 = vpack.c.bf16 %v85, %v84
    %v103 = vpack.c.bf16 %v87, %v86
    %104 = vmatprep.subr.bf16.mxu0 0
    %105 = vmatpush1.bf16.msra.mxu0 %v88
    %106 = vmatprep.subr.bf16.mxu0 0
    %107 = vmatpush1.bf16.msra.mxu0 %v89
    %108 = vmatprep.subr.bf16.mxu0 0
    %109 = vmatpush1.bf16.msra.mxu0 %v90
    %110 = vmatprep.subr.bf16.mxu0 0
    %111 = vmatpush1.bf16.msra.mxu0 %v91
    %112 = vmatprep.subr.bf16.mxu0 0
    %113 = vmatpush1.bf16.msra.mxu0 %v92
    %114 = vmatprep.subr.bf16.mxu0 0
    %115 = vmatpush1.bf16.msra.mxu0 %v93
    %116 = vmatprep.subr.bf16.mxu0 0
    %117 = vmatpush1.bf16.msra.mxu0 %v94
    %118 = vmatprep.subr.bf16.mxu0 0
    %119 = vmatpush1.bf16.msra.mxu0 %v95
    %120 = vmatprep.subr.bf16.mxu0 0
    %121 = vmatpush1.bf16.msra.mxu0 %v96
    %122 = vmatprep.subr.bf16.mxu0 0
    %123 = vmatpush1.bf16.msra.mxu0 %v97
    %124 = vmatprep.subr.bf16.mxu0 0
    %125 = vmatpush1.bf16.msra.mxu0 %v98
    %126 = vmatprep.subr.bf16.mxu0 0
    %127 = vmatpush1.bf16.msra.mxu0 %v99
    %128 = vmatprep.subr.bf16.mxu0 0
    %129 = vmatpush1.bf16.msra.mxu0 %v100
    %130 = vmatprep.subr.bf16.mxu0 0
    %131 = vmatpush1.bf16.msra.mxu0 %v101
    %132 = vmatprep.subr.bf16.mxu0 0
    %133 = vmatpush1.bf16.msra.mxu0 %v102
    %134 = vmatprep.subr.bf16.mxu0 0
    %135 = vmatpush1.bf16.msra.mxu0 %v103
    %136 = vmatprep.mubr.bf16.mxu0 %v55
    %137 = vmatmul.mubr.bf16.gmra.mrb[0].mxu0 %v54
    %v138 = vpop.f32.mrb[0].mxu0
    %v139 = vadd.f32 0.0, %v138
    %v140 = vpop.f32.mrb[0].mxu0
    %v141 = vpop.f32.mrb[0].mxu0
    %v142 = vpop.f32.mrb[0].mxu0
    %143 = vdwg.mxu0
    %p144 = scmp.eq.s32.totalorder 0, 0
    // Predicated region
    $region22: #{tpu_custom_call.1} parent=1 // pred_check
      %p145 = pneg %p144
    $region23: #{tpu_custom_call.1} parent=1 // pred_check_branch
      %147 = sbr.rel (%p145) target = $region25
    $region24: #{tpu_custom_call.1} parent=1 // pred_region
      %148 = vst [vmem:[#allocation7] sm:$0x3] %v139
    $region25: #{tpu_custom_call.1} parent=1 // pred_fallthru
      _
    %p149 = scmp.gt.s32.totalorder 0, 0
    // Predicated region
    $region26: #{tpu_custom_call.1} parent=1 // pred_check
      %p150 = pneg %p149
    $region27: #{tpu_custom_call.1} parent=1 // pred_check_branch
      %152 = sbr.rel (%p150) target = $region29
    $region28: #{tpu_custom_call.1} parent=1 // pred_region
      %v153 = vld [vmem:[#allocation7] sm:$0x3]
      %v154 = vadd.f32 %v153, %v139
      %155 = vst [vmem:[#allocation7] sm:$0x3] %v154
    $region29: #{tpu_custom_call.1} parent=1 // pred_fallthru
      _
    // Predicated region
    $region30: #{tpu_custom_call.1} parent=1 // pred_check
      %p156 = pneg %p144
    $region31: #{tpu_custom_call.1} parent=1 // pred_check_branch
      %158 = sbr.rel (%p156) target = $region33
    $region32: #{tpu_custom_call.1} parent=1 // pred_region
      %v159 = vld [vmem:[#allocation7] sm:$0x3]
      %v160 = vld [vmem:[%s2] sm:$0x1]
      %v162 = vlaneseq
      %v163 = vshrl.u32 %v162, 7
      %v164 = vsub.s32 0, %v163
      %v165 = vrot.slane %v160, %v164
      %v167 = vadd.f32 %v159, %v165
      %168 = vst [vmem:[#allocation7] sm:$0x3] %v167
    $region33: #{tpu_custom_call.1} parent=1 // pred_fallthru
      _
    // Predicated region
    $region34: #{tpu_custom_call.1} parent=1 // pred_check
      _
    $region35: #{tpu_custom_call.1} parent=1 // pred_check_branch
      %170 = sbr.rel (0) target = $region37
    $region36: #{tpu_custom_call.1} parent=1 // pred_region
      %s172 = ssub.s32 32, 32
      %173 = vsyncadd [#allocation4], %s172
      %s175 = sshll.u32 [#allocation7], 4
      %s176 = int_to_ptr.vmem [resolvable:$true] %s175
      %178 = dma.vmem_to_hbm [thread:$0]  %s176, 32, %s3, [#allocation4]
    $region37: #{tpu_custom_call.1} parent=1 // pred_fallthru
      _
    // Predicated region
    $region38: #{tpu_custom_call.1} parent=1 // pred_check
      _
    $region39: #{tpu_custom_call.1} parent=1 // pred_check_branch
      %180 = sbr.rel (0) target = $region41
    $region40: #{tpu_custom_call.1} parent=1 // pred_region
      %181 = dma.done [#allocation4], 32
    $region41: #{tpu_custom_call.1} parent=1 // pred_fallthru
      _
    %182 = vsyncpa [#allocation3], 1
    %183 = vsyncpa [#allocation6], 1
    %184 = vsyncpa [#allocation4], 1

</llo_original>
